<compile_context>
chip_gen: v7x
topology: tpu7x:2x2x1
jax: 0.10.0
libtpu: 0.0.40
codegen_flags: <defaults>
</compile_context>

<pallas_src>
import jax
import jax.numpy as jnp
from jax.experimental import pallas as pl
from jax.experimental.pallas import tpu as pltpu

_LANES = 128
_TARGET_BLOCK_BYTES = 2 * 1024 * 1024  # ~2 MiB per block


def _min_sublanes(dtype) -> int:
    # 8 sublanes for 4-byte dtypes, 16 for 2-byte, 32 for 1-byte (packed tiles).
    return max(8, 32 // jnp.dtype(dtype).itemsize)


def _make_steep_tanh_kernel(half_k: float):
    def kernel(x_ref, o_ref):
        x = x_ref[...].astype(jnp.float32)
        o_ref[...] = jnp.tanh(half_k * x).astype(o_ref.dtype)
    return kernel


def steep_tanh(x: jax.Array, k: float) -> jax.Array:
    """Elementwise tanh(k * x / 2) via a Pallas TPU kernel (any input shape)."""
    orig_shape = x.shape
    dtype = x.dtype
    n = x.size
    if n == 0:
        return x

    half_k = float(k) * 0.5  # fold the /2 into the scalar at trace time (fp32)

    itemsize = jnp.dtype(dtype).itemsize
    sub = _min_sublanes(dtype)

    # Lane-dense 2D view. Only pad when n is not a multiple of 128 (rare).
    needs_pad = (n % _LANES) != 0
    if needs_pad:
        rows = pl.cdiv(n, _LANES)
        x_flat = jnp.pad(jnp.ravel(x), (0, rows * _LANES - n))
        x2d = x_flat.reshape(rows, _LANES)
    else:
        rows = n // _LANES
        x2d = x.reshape(rows, _LANES)

    # ~2 MiB blocks, rounded to the dtype's minimum sublane multiple, clamped
    # so small inputs become a single block (no per-step overhead).
    tile_rows = max(sub, (_TARGET_BLOCK_BYTES // (_LANES * itemsize)) // sub * sub)
    rows_up = ((rows + sub - 1) // sub) * sub
    tile_rows = min(tile_rows, rows_up)
    grid_rows = pl.cdiv(rows, tile_rows)

    out2d = pl.pallas_call(
        _make_steep_tanh_kernel(half_k),
        out_shape=jax.ShapeDtypeStruct((rows, _LANES), dtype),
        grid=(grid_rows,),
        in_specs=[pl.BlockSpec((tile_rows, _LANES), lambda i: (i, 0))],
        out_specs=pl.BlockSpec((tile_rows, _LANES), lambda i: (i, 0)),
        compiler_params=pltpu.CompilerParams(
            dimension_semantics=("parallel",),
        ),
        cost_estimate=pl.CostEstimate(
            flops=rows * _LANES,
            transcendentals=rows * _LANES,
            bytes_accessed=2 * rows * _LANES * itemsize,
        ),
    )(x2d)

    if needs_pad:
        return out2d.reshape(-1)[:n].reshape(orig_shape)
    return out2d.reshape(orig_shape)


if __name__ == "__main__":
    key = jax.random.PRNGKey(0)
    # SteepTanh has no learned weights; only the scalar buffer k.
    k = 3.0
    x = jax.random.normal(key, (2, 4, 16, 16), dtype=jnp.float32)  # NCHW

    y = steep_tanh(x, k)
    y = jax.block_until_ready(y)

    # Reference check in plain JAX.
    y_ref = jnp.tanh(k * x / 2.0)
    assert y.shape == x.shape and y.dtype == x.dtype
    assert jnp.allclose(y, y_ref, atol=1e-6, rtol=1e-6)

    print("KERNEL_OK")
</pallas_src>

<mosaic_0001>
module attributes {stable_mosaic.version = 11 : i64} {
  func.func @kernel(%arg0: i32, %arg1: memref<16x128xf32, #tpu.memory_space<vmem>>, %arg2: memref<16x128xf32, #tpu.memory_space<vmem>>) attributes {dimension_semantics = [#tpu.dimension_semantics<parallel>], iteration_bounds = array<i64: 1>, scalar_prefetch = 0 : i64, scratch_operands = 0 : i64, tpu.core_type = #tpu.core_type<tc>, window_params = [{transform_indices = @transform_0, window_bounds = array<i64: 16, 128>}, {transform_indices = @transform_1, window_bounds = array<i64: 16, 128>}]} {
    %c0 = arith.constant 0 : index
    %c0_0 = arith.constant 0 : index
    %0 = vector.load %arg1[%c0, %c0_0] : memref<16x128xf32, #tpu.memory_space<vmem>>, vector<16x128xf32>
    %cst = arith.constant 1.500000e+00 : f32
    %1 = vector.broadcast %cst : f32 to vector<16x128xf32>
    %2 = arith.mulf %1, %0 : vector<16x128xf32>
    %3 = math.tanh %2 : vector<16x128xf32>
    %c0_1 = arith.constant 0 : index
    %c0_2 = arith.constant 0 : index
    %4 = vector.load %arg2[%c0_1, %c0_2] : memref<16x128xf32, #tpu.memory_space<vmem>>, vector<16x128xf32>
    tpu.vector_store %arg2[%c0_1, %c0_2], %3 {strides = array<i32>} : memref<16x128xf32, #tpu.memory_space<vmem>>, vector<16x128xf32>,
    return
  }
  func.func @transform_0(%arg0: i32) -> (i32, i32) {
    %c0_i32 = arith.constant 0 : i32
    %c0_i32_0 = arith.constant 0 : i32
    return %arg0, %c0_i32 : i32, i32
  }
  func.func @transform_1(%arg0: i32) -> (i32, i32) {
    %c0_i32 = arith.constant 0 : i32
    %c0_i32_0 = arith.constant 0 : i32
    return %arg0, %c0_i32 : i32, i32
  }
}

</mosaic_0001>

<llo_original>
// kernel: tpu_custom_call.1
$region0: #{tpu_custom_call.1}
  #allocation0 [shape = 'u32[]', space=smem, size = 0x4, offset = 0x4, fixed_abs, tag = 'smem constant byte address 0x4 - core index']
  #allocation1 [shape = 'u32[144,128]{1,0:T(1,128)}', space=vmem, size = 0x12000, scoped, tag = 'internal scratch']
  %s0 = inlined_call_operand.hbm [shape: f32[16,128], index: 0, kind: input, shape index: {}]
  %s1 = inlined_call_operand.hbm [shape: f32[16,128], index: 1, kind: output, shape index: {}]
  %s2 = sld [smem:[#allocation0]]
  $region18: #{tpu_custom_call.1} parent=0
    _
  %s4 = ssub.s32 1, %s2
  %s5 = scalar_select 0, %s4, %s2
  $region1: #{tpu_custom_call.1} parent=0
    #allocation2 [shape = 'u8[8192]{0}', space=vmem, size = 0x2000, scoped, tag = 'input window, operand 0, single buffered']
    #allocation3 [shape = 's32[1]{0}', space=sflag, size = 0x4, scoped, tag = 'scoped memory for tpu_custom_call.1']
    #allocation4 [shape = 's32[1]{0}', space=sflag, size = 0x4, scoped, tag = 'scoped memory for tpu_custom_call.1']
    #allocation5 [shape = 'u8[8192]{0}', space=vmem, size = 0x2000, scoped, tag = 'output window, operand 0, single buffered']
    %6 = vsyncpa [#allocation3], 0
    %7 = vsyncpa [#allocation4], 0
    // Predicated region
    $region2: #{tpu_custom_call.1} parent=1 // pred_check
      _
    $region3: #{tpu_custom_call.1} parent=1 // pred_check_branch
      %9 = sbr.rel (0) target = $region5
    $region4: #{tpu_custom_call.1} parent=1 // pred_region
      %s11 = ssub.s32 256, 256
      %12 = vsyncadd [#allocation3], %s11
      %s13 = sshll.u32 [#allocation2], 4
      %s14 = int_to_ptr.vmem [resolvable:$true] %s13
      %19 = dma.hbm_to_vmem [thread:$0]  %s0, 256, %s14, [#allocation3], 128, 128, 8
    $region5: #{tpu_custom_call.1} parent=1 // pred_fallthru
      _
    // Predicated region
    $region6: #{tpu_custom_call.1} parent=1 // pred_check
      _
    $region7: #{tpu_custom_call.1} parent=1 // pred_check_branch
      %21 = sbr.rel (0) target = $region9
    $region8: #{tpu_custom_call.1} parent=1 // pred_region
      %22 = dma.done [#allocation3], 256
    $region9: #{tpu_custom_call.1} parent=1 // pred_fallthru
      _
    %v23 = vld [vmem:[#allocation2] sm:$0xff]
    %v24 = vld [vmem:[#allocation2 + $0x8] sm:$0xff]
    %v25 = vmul.f32 %v23, 1.5
    %v26 = vmul.f32 %v24, 1.5
    %v27 = vtanh.pop %v25
    %v28 = vtanh.pop %v26
    %29 = vst [vmem:[#allocation5] sm:$0xff] %v27
    %30 = vst [vmem:[#allocation5 + $0x8] sm:$0xff] %v28
    // Predicated region
    $region10: #{tpu_custom_call.1} parent=1 // pred_check
      _
    $region11: #{tpu_custom_call.1} parent=1 // pred_check_branch
      %32 = sbr.rel (0) target = $region13
    $region12: #{tpu_custom_call.1} parent=1 // pred_region
      %s34 = ssub.s32 256, 256
      %35 = vsyncadd [#allocation4], %s34
      %s36 = sshll.u32 [#allocation5], 4
      %s37 = int_to_ptr.vmem [resolvable:$true] %s36
      %42 = dma.vmem_to_hbm [thread:$0]  %s37, 256, %s1, [#allocation4], 128, 128, 8
    $region13: #{tpu_custom_call.1} parent=1 // pred_fallthru
      _
    // Predicated region
    $region14: #{tpu_custom_call.1} parent=1 // pred_check
      _
    $region15: #{tpu_custom_call.1} parent=1 // pred_check_branch
      %44 = sbr.rel (0) target = $region17
    $region16: #{tpu_custom_call.1} parent=1 // pred_region
      %45 = dma.done [#allocation4], 256
    $region17: #{tpu_custom_call.1} parent=1 // pred_fallthru
      _
    %46 = vsyncpa [#allocation3], 1
    %47 = vsyncpa [#allocation4], 1

</llo_original>
